<compile_context>
chip_gen: v7x
topology: tpu7x:2x2x1
jax: 0.10.0
libtpu: 0.0.40
codegen_flags: <defaults>
</compile_context>

<pallas_src>
import functools

import jax
import jax.numpy as jnp
from jax import lax
from jax.experimental import pallas as pl
from jax.experimental.pallas import tpu as pltpu


_LANE = 128
_DEFAULT_VMEM_LIMIT = 32 << 20   # compiler's scoped-VMEM default (v6e/v7x)
_MAX_VMEM_LIMIT = 96 << 20
_FEATURE_TILE_BUDGET = 24 << 20  # budget for double-buffered feature K-tiles


def _round_up(x, m):
    return (x + m - 1) // m * m


def _pick_tm(M, forced=None):
    """Row-block the Gram output only when M is large enough that the resident
    (M, M) f32 buffers threaten VMEM (v7x: 64 MiB) and the MXU-bound regime pays
    for re-streaming features once per row block / using the second TensorCore."""
    if forced is not None and M % forced == 0:
        return forced
    if M >= 1024:
        for tm in (512, 256, 128):
            if M % tm == 0:
                return tm
    return M


def _pick_tk(rows_per_step, Kp, itemsize, forced=None):
    """Largest K tile (multiple of 128 dividing the padded K, capped at 2048) whose
    double-buffered feature blocks fit the VMEM budget.  Large tiles amortize the
    ~0.35us per-grid-step overhead (128-wide tiles reach only ~30% of roofline)."""
    if forced is not None and Kp % forced == 0:
        return forced
    cap = min(Kp, 2048)
    best = _LANE
    t = _LANE
    while t <= cap:
        if Kp % t == 0 and 2 * rows_per_step * t * itemsize <= _FEATURE_TILE_BUDGET:
            best = t
        t += _LANE
    return best


def _vmem_limit(est_bytes):
    return int(min(max(int(1.5 * est_bytes) + (4 << 20), _DEFAULT_VMEM_LIMIT),
                   _MAX_VMEM_LIMIT))


def _prep_features(x):
    """(N, C, H, W) -> (M, Kp) feature matrix, K zero-padded to a multiple of 128.
    Keeps the input dtype (bf16 features stream as bf16; accumulation is f32)."""
    n, c, h, w = x.shape
    M, K = n * c, h * w
    feats = x.reshape(M, K)
    Kp = _round_up(K, _LANE)
    if Kp != K:
        feats = jnp.pad(feats, ((0, 0), (0, Kp - K)))
    return feats, M, K


# --------------------------------------------------------------------------- kernels

def _gram_kernel(*refs, row_blocked, inv_total):
    """Accumulate G[m-block] = feat_rows @ feat.T over K tiles; scale at the end."""
    if row_blocked:
        rows_ref, allf_ref, g_ref, acc_ref = refs
    else:
        rows_ref, g_ref, acc_ref = refs
        allf_ref = rows_ref

    k = pl.program_id(1)

    @pl.when(k == 0)
    def _():
        acc_ref[...] = jnp.zeros_like(acc_ref)

    # (tm, tk) x (M, tk) contracted over K (the last axis of BOTH operands) -> (tm, M);
    # no explicit transpose of the K tile.
    acc_ref[...] += lax.dot_general(
        rows_ref[...], allf_ref[...],
        dimension_numbers=(((1,), (1,)), ((), ())),
        preferred_element_type=jnp.float32)

    @pl.when(k == pl.num_programs(1) - 1)
    def _():
        g_ref[...] = (acc_ref[...] * inv_total).astype(g_ref.dtype)


def _style_loss_kernel(feat_ref, tgt_ref, loss_ref, acc_ref, *, inv_total, inv_mm):
    """Accumulate the Gram over K tiles; finalize with scale + MSE vs target.
    Only the scalar loss is written out (no (M, M) Gram writeback to HBM)."""
    k = pl.program_id(0)

    @pl.when(k == 0)
    def _():
        acc_ref[...] = jnp.zeros_like(acc_ref)

    f = feat_ref[...]
    acc_ref[...] += lax.dot_general(
        f, f, dimension_numbers=(((1,), (1,)), ((), ())),
        preferred_element_type=jnp.float32)

    @pl.when(k == pl.num_programs(0) - 1)
    def _():
        diff = acc_ref[...] * inv_total - tgt_ref[...]
        # Scalar loss kept as a (1, 1) VMEM block (proven lowering path; the gain
        # from an untiled SMEM scalar output is negligible here).
        loss_ref[0, 0] = jnp.sum(diff * diff) * inv_mm


# --------------------------------------------------------------------------- wrappers

def _gram_pallas(feats, M, K, *, out_dtype=jnp.float32, tm=None, tk=None):
    Mf, Kp = feats.shape
    assert Mf == M
    tm = _pick_tm(M, tm)
    row_blocked = tm != M
    rows_per_step = tm + (M if row_blocked else 0)
    tk = _pick_tk(rows_per_step, Kp, feats.dtype.itemsize, tk)
    n_m, n_k = M // tm, Kp // tk

    kernel = functools.partial(_gram_kernel, row_blocked=row_blocked,
                               inv_total=1.0 / float(M * K))

    in_specs = [pl.BlockSpec((tm, tk), lambda m, k: (m, k))]
    operands = [feats]
    if row_blocked:
        # Full-width (M, tk) slab for the RHS of each row block (same array, 2nd spec).
        in_specs.append(pl.BlockSpec((M, tk), lambda m, k: (0, k)))
        operands.append(feats)

    est = (2 * rows_per_step * tk * feats.dtype.itemsize      # feature double-buffers
           + tm * M * 4                                       # accumulator scratch
           + 2 * tm * M * jnp.dtype(out_dtype).itemsize)      # G output double-buffer

    return pl.pallas_call(
        kernel,
        out_shape=jax.ShapeDtypeStruct((M, M), out_dtype),
        grid_spec=pltpu.PrefetchScalarGridSpec(
            num_scalar_prefetch=0,
            grid=(n_m, n_k),
            in_specs=in_specs,
            out_specs=pl.BlockSpec((tm, M), lambda m, k: (m, 0)),
            scratch_shapes=[pltpu.VMEM((tm, M), jnp.float32)],
        ),
        compiler_params=pltpu.CompilerParams(
            dimension_semantics=("parallel", "arbitrary"),
            vmem_limit_bytes=_vmem_limit(est)),
    )(*operands)


def _style_loss_pallas(feats, target_gram, M, K, *, tk=None):
    Mf, Kp = feats.shape
    assert Mf == M and target_gram.shape == (M, M)
    # TODO(synk): for very large M (>~2048) also row-block this path (per-block partial
    # losses summed in the wrapper) so acc + target fit v7x's 64 MiB VMEM; typical
    # style-transfer M = N*C (<= 512) does not need it.
    tk = _pick_tk(M, Kp, feats.dtype.itemsize, tk)
    n_k = Kp // tk

    kernel = functools.partial(_style_loss_kernel,
                               inv_total=1.0 / float(M * K),
                               inv_mm=1.0 / float(M * M))

    est = (2 * M * tk * feats.dtype.itemsize   # feature double-buffer
           + M * M * 4                         # accumulator scratch
           + 2 * M * M * 4)                    # target double-buffer

    loss = pl.pallas_call(
        kernel,
        out_shape=jax.ShapeDtypeStruct((1, 1), jnp.float32),
        grid_spec=pltpu.PrefetchScalarGridSpec(
            num_scalar_prefetch=0,
            grid=(n_k,),
            in_specs=[pl.BlockSpec((M, tk), lambda k: (0, k)),
                      pl.BlockSpec((M, M), lambda k: (0, 0))],
            out_specs=pl.BlockSpec((1, 1), lambda k: (0, 0)),
            scratch_shapes=[pltpu.VMEM((M, M), jnp.float32)],
        ),
        compiler_params=pltpu.CompilerParams(
            dimension_semantics=("arbitrary",),        # K axis is a reduction
            vmem_limit_bytes=_vmem_limit(est)),
    )(feats, target_gram.astype(jnp.float32))
    return loss[0, 0]


def gram_matrix(x, *, tm=None, tk=None):
    """x: (N, C, H, W) -> (N*C, N*C) Gram matrix divided by N*C*H*W (gram-only kernel)."""
    feats, M, K = _prep_features(x)
    return _gram_pallas(feats, M, K, tm=tm, tk=tk)


def style_mse_loss(x, target_gram, *, tk=None):
    """mse_loss(gram_matrix(x), target_gram) as one fused kernel (no Gram writeback)."""
    feats, M, K = _prep_features(x)
    return _style_loss_pallas(feats, target_gram, M, K, tk=tk)


class StyleLoss:
    """Mirror of the PyTorch StyleLoss module: forward is a pass-through, loss stored."""

    def __init__(self, target_feature):
        self.target = gram_matrix(target_feature)   # detached constant, f32
        self.loss = None

    def __call__(self, x):
        self.loss = style_mse_loss(x, self.target)
        return x


if __name__ == "__main__":
    key = jax.random.PRNGKey(0)
    k1, k2 = jax.random.split(key)
    # (N, C, H, W) = (2, 4, 16, 16), consistent with a conv feature map.
    target_feature = jax.random.normal(k1, (2, 4, 16, 16), dtype=jnp.float32)
    x = jax.random.normal(k2, (2, 4, 16, 16), dtype=jnp.float32)

    module = StyleLoss(target_feature)
    out = module(x)
    out = jax.block_until_ready(out)
    loss = jax.block_until_ready(module.loss)

    # Pure-JAX reference of the full forward semantics.
    def ref_gram(t):
        n, c, h, w = t.shape
        f = t.reshape(n * c, h * w).astype(jnp.float32)
        return (f @ f.T) / (n * c * h * w)

    ref_target = ref_gram(target_feature)
    ref_loss = jnp.mean((ref_gram(x) - ref_target) ** 2)

    assert out.shape == x.shape and jnp.allclose(out, x)          # forward returns input
    assert jnp.allclose(module.target, ref_target, rtol=1e-2, atol=1e-3)
    assert jnp.allclose(loss, ref_loss, rtol=1e-5, atol=1e-6), (loss, ref_loss)

    # Also exercise the row-blocked (parallel-M) Gram path with small forced tiles.
    xb = jax.random.normal(jax.random.PRNGKey(1), (1, 16, 16, 16), dtype=jnp.float32)
    g_blk = jax.block_until_ready(gram_matrix(xb, tm=8, tk=128))
    assert jnp.allclose(g_blk, ref_gram(xb), rtol=1e-2, atol=1e-3)

    print("KERNEL_OK")
</pallas_src>

<mosaic_0001>
module attributes {stable_mosaic.version = 11 : i64} {
  func.func @_gram_kernel(%arg0: i32, %arg1: i32, %arg2: memref<8x256xf32, #tpu.memory_space<vmem>>, %arg3: memref<8x8xf32, #tpu.memory_space<vmem>>, %arg4: memref<8x8xf32, #tpu.memory_space<vmem>>) attributes {dimension_semantics = [#tpu.dimension_semantics<parallel>, #tpu.dimension_semantics<arbitrary>], iteration_bounds = array<i64: 1, 1>, scalar_prefetch = 0 : i64, scratch_operands = 1 : i64, tpu.core_type = #tpu.core_type<tc>, window_params = [{transform_indices = @transform_0, window_bounds = array<i64: 8, 256>}, {transform_indices = @transform_1, window_bounds = array<i64: 8, 8>}]} {
    %c0_i32 = arith.constant 0 : i32
    %0 = arith.cmpi eq, %arg1, %c0_i32 : i32
    %1 = arith.extui %0 : i1 to i32
    %c0_i32_0 = arith.constant 0 : i32
    %2 = arith.cmpi ne, %1, %c0_i32_0 : i32
    scf.if %2 {
      %cst_10 = arith.constant 0.000000e+00 : f32
      %12 = vector.broadcast %cst_10 : f32 to vector<8x8xf32>
      %c0_11 = arith.constant 0 : index
      %c0_12 = arith.constant 0 : index
      %13 = vector.load %arg4[%c0_11, %c0_12] : memref<8x8xf32, #tpu.memory_space<vmem>>, vector<8x8xf32>
      tpu.vector_store %arg4[%c0_11, %c0_12], %12 {strides = array<i32>} : memref<8x8xf32, #tpu.memory_space<vmem>>, vector<8x8xf32>,
    } else {
    }
    %c0 = arith.constant 0 : index
    %c0_1 = arith.constant 0 : index
    %3 = vector.load %arg4[%c0, %c0_1] : memref<8x8xf32, #tpu.memory_space<vmem>>, vector<8x8xf32>
    %c0_2 = arith.constant 0 : index
    %c0_3 = arith.constant 0 : index
    %4 = vector.load %arg2[%c0_2, %c0_3] : memref<8x256xf32, #tpu.memory_space<vmem>>, vector<8x256xf32>
    %c0_4 = arith.constant 0 : index
    %c0_5 = arith.constant 0 : index
    %5 = vector.load %arg2[%c0_4, %c0_5] : memref<8x256xf32, #tpu.memory_space<vmem>>, vector<8x256xf32>
    %cst = arith.constant dense<0.000000e+00> : vector<8x8xf32>
    %6 = tpu.matmul %4, %5, %cst {dimension_numbers = #tpu.dot_dimension_numbers<[1], [1], [0], [0], [0, 0, 1, 0], [], []>} : vector<8x256xf32>, vector<8x256xf32>, vector<8x8xf32> -> vector<8x8xf32>
    %7 = arith.addf %3, %6 : vector<8x8xf32>
    %c0_6 = arith.constant 0 : index
    %c0_7 = arith.constant 0 : index
    %8 = vector.load %arg4[%c0_6, %c0_7] : memref<8x8xf32, #tpu.memory_space<vmem>>, vector<8x8xf32>
    tpu.vector_store %arg4[%c0_6, %c0_7], %7 {strides = array<i32>} : memref<8x8xf32, #tpu.memory_space<vmem>>, vector<8x8xf32>,
    %c0_i32_8 = arith.constant 0 : i32
    %9 = arith.cmpi eq, %arg1, %c0_i32_8 : i32
    %10 = arith.extui %9 : i1 to i32
    %c0_i32_9 = arith.constant 0 : i32
    %11 = arith.cmpi ne, %10, %c0_i32_9 : i32
    scf.if %11 {
      %c0_10 = arith.constant 0 : index
      %c0_11 = arith.constant 0 : index
      %12 = vector.load %arg4[%c0_10, %c0_11] : memref<8x8xf32, #tpu.memory_space<vmem>>, vector<8x8xf32>
      %cst_12 = arith.constant 4.8828125E-4 : f32
      %13 = vector.broadcast %cst_12 : f32 to vector<8x8xf32>
      %14 = arith.mulf %12, %13 : vector<8x8xf32>
      %c0_13 = arith.constant 0 : index
      %c0_14 = arith.constant 0 : index
      %15 = vector.load %arg3[%c0_13, %c0_14] : memref<8x8xf32, #tpu.memory_space<vmem>>, vector<8x8xf32>
      tpu.vector_store %arg3[%c0_13, %c0_14], %14 {strides = array<i32>} : memref<8x8xf32, #tpu.memory_space<vmem>>, vector<8x8xf32>,
    } else {
    }
    return
  }
  func.func @transform_0(%arg0: i32, %arg1: i32) -> (i32, i32) {
    %c0_i32 = arith.constant 0 : i32
    return %arg0, %arg1 : i32, i32
  }
  func.func @transform_1(%arg0: i32, %arg1: i32) -> (i32, i32) {
    %c0_i32 = arith.constant 0 : i32
    %c0_i32_0 = arith.constant 0 : i32
    return %arg0, %c0_i32 : i32, i32
  }
}

</mosaic_0001>

<llo_original>
// kernel: tpu_custom_call.1
$region0: #{tpu_custom_call.1}
  #allocation0 [shape = 'u32[]', space=smem, size = 0x4, offset = 0x4, fixed_abs, tag = 'smem constant byte address 0x4 - core index']
  #allocation1 [shape = 'u32[144,128]{1,0:T(1,128)}', space=vmem, size = 0x12000, scoped, tag = 'internal scratch']
  #allocation2 [shape = 'f32[8,8]{1,0:T(8,128)}', space=vmem, size = 0x1000, scoped, tag = 'scratch operand']
  %s0 = inlined_call_operand.hbm [shape: f32[8,256], index: 0, kind: input, shape index: {}]
  %s1 = inlined_call_operand.hbm [shape: f32[8,8], index: 1, kind: output, shape index: {}]
  %s2 = sld [smem:[#allocation0]]
  $region26: #{tpu_custom_call.1} parent=0
    _
  %s4 = ssub.s32 1, %s2
  %s5 = scalar_select 0, %s4, %s2
  $region1: #{tpu_custom_call.1} parent=0
    #allocation3 [shape = 'u8[8192]{0}', space=vmem, size = 0x2000, scoped, tag = 'input window, operand 0, single buffered']
    #allocation4 [shape = 's32[1]{0}', space=sflag, size = 0x4, scoped, tag = 'scoped memory for tpu_custom_call.1']
    #allocation5 [shape = 's32[1]{0}', space=sflag, size = 0x4, scoped, tag = 'scoped memory for tpu_custom_call.1']
    #allocation6 [shape = 'u8[4096]{0}', space=vmem, size = 0x1000, scoped, tag = 'output window, operand 0, single buffered']
    %6 = vsyncpa [#allocation4], 0
    %7 = vsyncpa [#allocation5], 0
    // Predicated region
    $region2: #{tpu_custom_call.1} parent=1 // pred_check
      _
    $region3: #{tpu_custom_call.1} parent=1 // pred_check_branch
      %9 = sbr.rel (0) target = $region5
    $region4: #{tpu_custom_call.1} parent=1 // pred_region
      %s11 = ssub.s32 256, 256
      %12 = vsyncadd [#allocation4], %s11
      %s14 = sshll.u32 [#allocation3], 4
      %s15 = int_to_ptr.vmem [resolvable:$true] %s14
      %17 = dma.hbm_to_vmem [thread:$0]  %s0, 256, %s15, [#allocation4]
    $region5: #{tpu_custom_call.1} parent=1 // pred_fallthru
      _
    // Predicated region
    $region6: #{tpu_custom_call.1} parent=1 // pred_check
      _
    $region7: #{tpu_custom_call.1} parent=1 // pred_check_branch
      %19 = sbr.rel (0) target = $region9
    $region8: #{tpu_custom_call.1} parent=1 // pred_region
      %20 = dma.done [#allocation4], 256
    $region9: #{tpu_custom_call.1} parent=1 // pred_fallthru
      _
    %p21 = scmp.eq.s32.totalorder 0, 0
    // Predicated region
    $region10: #{tpu_custom_call.1} parent=1 // pred_check
      %p22 = pneg %p21
    $region11: #{tpu_custom_call.1} parent=1 // pred_check_branch
      %24 = sbr.rel (%p22) target = $region13
    $region12: #{tpu_custom_call.1} parent=1 // pred_region
      %vm25 = vcmask 64512
      %26 = vst.msk [vmem:[#allocation2] sm:$0xff] %vm25, 0.0
    $region13: #{tpu_custom_call.1} parent=1 // pred_fallthru
      _
    %v27 = vld [vmem:[#allocation2] sm:$0xff]
    %v28 = vld [vmem:[#allocation3] sm:$0xff]
    %v29 = vld [vmem:[#allocation3 + $0x8] sm:$0xff]
    %30 = vmatprep.subr.mxu0 %v29
    %31 = vmatpush1.xpose.msra.mxu0 %v28
    %32 = vmatprep.subr.mxu0 0.0
    %33 = vmatpush1.xpose.msra.mxu0 0.0
    %34 = vmatprep.subr.mxu0 0.0
    %35 = vmatpush1.xpose.msra.mxu0 0.0
    %36 = vmatprep.subr.mxu0 0.0
    %37 = vmatpush1.xpose.msra.mxu0 0.0
    %38 = vmatprep.subr.mxu0 0.0
    %39 = vmatpush1.xpose.msra.mxu0 0.0
    %40 = vmatprep.subr.mxu0 0.0
    %41 = vmatpush1.xpose.msra.mxu0 0.0
    %42 = vmatprep.subr.mxu0 0.0
    %43 = vmatpush1.xpose.msra.mxu0 0.0
    %44 = vmatprep.subr.mxu0 0.0
    %45 = vmatpush1.xpose.msra.mxu0 0.0
    %46 = vmatprep.subr.mxu0 0.0
    %47 = vmatpush1.xpose.msra.mxu0 0.0
    %48 = vmatprep.subr.mxu0 0.0
    %49 = vmatpush1.xpose.msra.mxu0 0.0
    %50 = vmatprep.subr.mxu0 0.0
    %51 = vmatpush1.xpose.msra.mxu0 0.0
    %52 = vmatprep.subr.mxu0 0.0
    %53 = vmatpush1.xpose.msra.mxu0 0.0
    %54 = vmatprep.subr.mxu0 0.0
    %55 = vmatpush1.xpose.msra.mxu0 0.0
    %56 = vmatprep.subr.mxu0 0.0
    %57 = vmatpush1.xpose.msra.mxu0 0.0
    %58 = vmatprep.subr.mxu0 0.0
    %59 = vmatpush1.xpose.msra.mxu0 0.0
    %60 = vmatprep.subr.mxu0 0.0
    %61 = vmatpush1.xpose.msra.mxu0 0.0
    %62 = vmatprep.subr.mxu0 0.0
    %63 = vmatpush1.xpose.msra.mxu0 0.0
    %64 = vmatprep.subr.mxu0 0.0
    %65 = vmatpush1.xpose.msra.mxu0 0.0
    %66 = vmatprep.subr.mxu0 0.0
    %67 = vmatpush1.xpose.msra.mxu0 0.0
    %68 = vmatprep.subr.mxu0 0.0
    %69 = vmatpush1.xpose.msra.mxu0 0.0
    %70 = vmatprep.subr.mxu0 0.0
    %71 = vmatpush1.xpose.msra.mxu0 0.0
    %72 = vmatprep.subr.mxu0 0.0
    %73 = vmatpush1.xpose.msra.mxu0 0.0
    %74 = vmatprep.subr.mxu0 0.0
    %75 = vmatpush1.xpose.msra.mxu0 0.0
    %76 = vmatprep.subr.mxu0 0.0
    %77 = vmatpush1.xpose.msra.mxu0 0.0
    %78 = vmatprep.subr.mxu0 0.0
    %79 = vmatpush1.xpose.msra.mxu0 0.0
    %80 = vmatprep.subr.mxu0 0.0
    %81 = vmatpush1.xpose.msra.mxu0 0.0
    %82 = vmatprep.subr.mxu0 0.0
    %83 = vmatpush1.xpose.msra.mxu0 0.0
    %84 = vmatprep.subr.mxu0 0.0
    %85 = vmatpush1.xpose.msra.mxu0 0.0
    %86 = vmatprep.subr.mxu0 0.0
    %87 = vmatpush1.xpose.msra.mxu0 0.0
    %88 = vmatprep.subr.mxu0 0.0
    %89 = vmatpush1.xpose.msra.mxu0 0.0
    %90 = vmatprep.subr.mxu0 0.0
    %91 = vmatpush1.xpose.msra.mxu0 0.0
    %92 = vmatprep.subr.mxu0 0.0
    %93 = vmatpush1.xpose.msra.mxu0 0.0
    %94 = vmatprep.mubr.f32.mxu0 %v29
    %95 = vmatmul.mubr.f32.gmra.mrb[0].mxu0 %v28
    %v96 = vpop.f32.mrb[0].mxu0
    %v97 = vadd.f32 0.0, %v96
    %v98 = vpop.f32.mrb[0].mxu0
    %99 = vdwg.mxu0
    %v100 = vadd.f32 %v27, %v97
    %vm101 = vcmask 64512
    %102 = vst.msk [vmem:[#allocation2] sm:$0xff] %vm101, %v100
    // Predicated region
    $region14: #{tpu_custom_call.1} parent=1 // pred_check
      %p103 = pneg %p21
    $region15: #{tpu_custom_call.1} parent=1 // pred_check_branch
      %105 = sbr.rel (%p103) target = $region17
    $region16: #{tpu_custom_call.1} parent=1 // pred_region
      %v106 = vld [vmem:[#allocation2] sm:$0xff]
      %v107 = vmul.f32 %v106, 0.00048828125
      %108 = vst.msk [vmem:[#allocation6] sm:$0xff] %vm101, %v107
    $region17: #{tpu_custom_call.1} parent=1 // pred_fallthru
      _
    // Predicated region
    $region18: #{tpu_custom_call.1} parent=1 // pred_check
      _
    $region19: #{tpu_custom_call.1} parent=1 // pred_check_branch
      %110 = sbr.rel (0) target = $region21
    $region20: #{tpu_custom_call.1} parent=1 // pred_region
      %s112 = ssub.s32 128, 128
      %113 = vsyncadd [#allocation5], %s112
      %s115 = sshll.u32 [#allocation6], 4
      %s116 = int_to_ptr.vmem [resolvable:$true] %s115
      %118 = dma.vmem_to_hbm [thread:$0]  %s116, 128, %s1, [#allocation5]
    $region21: #{tpu_custom_call.1} parent=1 // pred_fallthru
      _
    // Predicated region
    $region22: #{tpu_custom_call.1} parent=1 // pred_check
      _
    $region23: #{tpu_custom_call.1} parent=1 // pred_check_branch
      %120 = sbr.rel (0) target = $region25
    $region24: #{tpu_custom_call.1} parent=1 // pred_region
      %121 = dma.done [#allocation5], 128
    $region25: #{tpu_custom_call.1} parent=1 // pred_fallthru
      _
    %122 = vsyncpa [#allocation4], 1
    %123 = vsyncpa [#allocation5], 1

</llo_original>
